<compile_context>
chip_gen: v5e
topology: v5e:2x2
jax: 0.10.0
libtpu: 0.0.40
codegen_flags: <defaults>
</compile_context>

<pallas_src>
import functools

import jax
import jax.numpy as jnp
from jax import lax
from jax.experimental import pallas as pl
from jax.experimental.pallas import tpu as pltpu

OP_NAMES = ("none", "skip_connect", "nor_conv_1x1", "nor_conv_3x3", "avg_pool_3x3")


# ----------------------------------------------------------------------------- roll convention probe
def _detect_roll_sign():
    """Returns s such that pltpu.roll(x, (s*off) % M, 1)[p] == x[p + off]."""
    def k(x_ref, o_ref):
        o_ref[...] = pltpu.roll(x_ref[...], 1, 1)

    x = jnp.broadcast_to(jnp.arange(128, dtype=jnp.float32)[None, :], (8, 128))
    out = pl.pallas_call(k, out_shape=jax.ShapeDtypeStruct((8, 128), jnp.float32))(x)
    # jnp.roll convention: out[0] == x[-1] == 127  ->  need shift = -off
    return -1 if float(out[0, 0]) > 64.0 else 1


_ROLL_SIGN = _detect_roll_sign()


# ----------------------------------------------------------------------------- fused SearchCell kernel
def _make_cell_kernel(C, Cp, W, Mp, edge_plan, n_src):
    """Whole-cell kernel: chained mixed-op node computation in channel-major (C, Mp) layout."""
    taps = [(di, dj) for di in range(3) for dj in range(3)]
    by_src = {}
    for e, (j, i) in enumerate(edge_plan):
        by_src.setdefault(j, []).append((e, i))

    def kernel(x_ref, wc_ref, bias_ref, ask_ref, apl_ref, mask_ref, invc_ref,
               o_ref, p_ref):
        if Cp != C:                               # zero the channel-padding rows once
            p_ref[...] = jnp.zeros_like(p_ref)
        invc = invc_ref[...]                      # (1, Mp)  1/valid-count (0 on lane padding)
        acc = {}                                  # target node -> (C, Mp) f32 partial sum
        node = x_ref[...]                         # current source node value, f32
        for j in range(n_src):
            # ---- in-kernel im2col of node j: 9 lane-rolls + boundary masks -------------------
            tapsum = None
            for t, (di, dj) in enumerate(taps):
                off = (di - 1) * W + (dj - 1)
                shifted = node if off == 0 else pltpu.roll(node, (_ROLL_SIGN * off) % Mp, 1)
                tap = shifted * mask_ref[t]       # (C, Mp) * (1, Mp) -> zero outside image
                tapsum = tap if tapsum is None else tapsum + tap
                p_ref[t * Cp:t * Cp + C, :] = jnp.maximum(tap, 0.0).astype(p_ref.dtype)
            patches = p_ref[...]                  # (9*Cp, Mp) bf16, ReLU'd taps (conv input)
            pool_base = tapsum * invc             # avg_pool_3x3, count_include_pad=False
            # ---- all outgoing edges of node j: one MXU dot each + VPU skip/pool --------------
            for e, i in by_src[j]:
                contrib = jnp.dot(wc_ref[e], patches, preferred_element_type=jnp.float32)
                contrib = contrib + bias_ref[e]
                contrib = contrib + ask_ref[e] * node + apl_ref[e] * pool_base
                acc[i] = contrib if i not in acc else acc[i] + contrib
            node = acc[j + 1]                     # node j+1 is now complete
        o_ref[...] = node                         # final node of the cell

    return kernel


# ----------------------------------------------------------------------------- trace-time helpers
def _conv3x3_rowmat(w, Cp):
    """(Cout, Cin, 3, 3) -> (Cout, 9*Cp): column block t=di*3+dj holds w[:, :, di, dj]."""
    Cout, Cin = w.shape[:2]
    g = jnp.transpose(w, (0, 2, 3, 1)).reshape(Cout, 9, Cin)
    g = jnp.pad(g, ((0, 0), (0, 0), (0, Cp - Cin)))
    return g.reshape(Cout, 9 * Cp)


def _conv1x1_rowmat(w, Cp):
    """(Cout, Cin, 1, 1) -> (Cout, 9*Cp) with the weight embedded at the center tap."""
    Cout, Cin = w.shape[:2]
    g = jnp.zeros((Cout, 9, Cp), w.dtype).at[:, 4, :Cin].set(w[:, :, 0, 0])
    return g.reshape(Cout, 9 * Cp)


def _spatial_masks(Nb, H, W, Mp):
    """Per-tap validity masks (9,1,Mp) and 1/valid-count (1,Mp) for 3x3/stride1/pad1 windows."""
    M = Nb * H * W
    hh = jnp.arange(H)[:, None]
    ww = jnp.arange(W)[None, :]
    masks = []
    for di in range(3):
        for dj in range(3):
            valid = ((hh + di - 1 >= 0) & (hh + di - 1 < H) &
                     (ww + dj - 1 >= 0) & (ww + dj - 1 < W)).astype(jnp.float32)
            flat = jnp.broadcast_to(valid[None], (Nb, H, W)).reshape(1, M)
            masks.append(jnp.pad(flat, ((0, 0), (0, Mp - M))))
    masks = jnp.stack(masks, axis=0)                        # (9, 1, Mp)
    cnt = jnp.sum(masks, axis=0)                            # (1, Mp)
    invc = jnp.where(cnt > 0, 1.0 / jnp.maximum(cnt, 1.0), 0.0)
    return masks, invc


def search_cell_fused(x_nhwc, edge_params, alphas, *, max_nodes, edge2index, op_idx):
    """One fused Pallas call for a whole SearchCell (mixed ops, all edges, all nodes)."""
    Nb, H, W, C = x_nhwc.shape
    M = Nb * H * W
    Mp = max(128, ((M + 127) // 128) * 128)     # lane-pad the pixel axis
    Cp = ((C + 7) // 8) * 8                     # sublane-aligned channel blocks in the patch stack

    edge_plan = [(j, i) for j in range(max_nodes - 1) for i in range(j + 1, max_nodes)]

    def alpha_of(row, name):
        return row[op_idx[name]] if name in op_idx else jnp.float32(0.0)

    ones_c = jnp.ones((C, 1), jnp.float32)
    wc_l, b_l, ask_l, apl_l = [], [], [], []
    for (j, i) in edge_plan:                    # kernel order: grouped by source node
        idx = edge2index[(i, j)]
        row = alphas[idx]
        ep = edge_params[idx]
        s1, b1 = ep["conv1"]["sb"]
        s3, b3 = ep["conv3"]["sb"]
        a1 = alpha_of(row, "nor_conv_1x1")
        a3 = alpha_of(row, "nor_conv_3x3")
        g1 = _conv1x1_rowmat(ep["conv1"]["w"], Cp)
        g3 = _conv3x3_rowmat(ep["conv3"]["w"], Cp)
        wc_l.append(a1 * s1[:, None] * g1 + a3 * s3[:, None] * g3)   # alpha & BN folded
        b_l.append((a1 * b1 + a3 * b3)[:, None])
        ask_l.append(alpha_of(row, "skip_connect") * ones_c)
        apl_l.append(alpha_of(row, "avg_pool_3x3") * ones_c)
        # 'none' op contributes exactly zero -> skipped entirely.

    wc = jnp.stack(wc_l).astype(jnp.bfloat16)        # (E, C, 9*Cp)  MXU operand
    bias = jnp.stack(b_l).astype(jnp.float32)        # (E, C, 1)
    ask = jnp.stack(ask_l).astype(jnp.float32)       # (E, C, 1)  skip_connect alphas
    apl = jnp.stack(apl_l).astype(jnp.float32)       # (E, C, 1)  avg_pool alphas

    masks, invc = _spatial_masks(Nb, H, W, Mp)       # constants -> XLA folds them

    x_cm = jnp.transpose(x_nhwc, (3, 0, 1, 2)).reshape(C, M).astype(jnp.float32)
    x_cm = jnp.pad(x_cm, ((0, 0), (0, Mp - M)))

    kernel = _make_cell_kernel(C, Cp, W, Mp, edge_plan, max_nodes - 1)
    # Single grid step: every operand fits in VMEM many times over; on v7x a leading
    # batch-"parallel" grid axis could be added to feed the second TensorCore.
    out_cm = pl.pallas_call(
        kernel,
        out_shape=jax.ShapeDtypeStruct((C, Mp), jnp.float32),
        scratch_shapes=[pltpu.VMEM((9 * Cp, Mp), jnp.bfloat16)],   # shared ReLU'd patch stack
    )(x_cm, wc, bias, ask, apl, masks, invc)

    return out_cm[:, :M].reshape(C, Nb, H, W).transpose(1, 2, 3, 0)


# ----------------------------------------------------------------------------- tiny XLA glue ops
def conv2d_nhwc(x, w_oihw, stride, pad):
    w_hwio = jnp.transpose(w_oihw, (2, 3, 1, 0))
    return lax.conv_general_dilated(
        x, w_hwio, window_strides=(stride, stride),
        padding=[(pad, pad), (pad, pad)],
        dimension_numbers=("NHWC", "HWIO", "NHWC"))


def avg_pool_2x2(x):
    N, H, W, C = x.shape
    return x.reshape(N, H // 2, 2, W // 2, 2, C).mean(axis=(2, 4))


def resnet_block_forward(x, p):
    """ResNetBasicblock(stride=2): tiny convs, left to XLA per the perf review."""
    sa, ba = p["conv_a"]["sb"]
    sb_, bb_ = p["conv_b"]["sb"]
    ya = conv2d_nhwc(jnp.maximum(x, 0.0), p["conv_a"]["w"], 2, 1) * sa + ba
    yb = conv2d_nhwc(jnp.maximum(ya, 0.0), p["conv_b"]["w"], 1, 1) * sb_ + bb_
    res = jnp.einsum("nhwi,oi->nhwo", avg_pool_2x2(x), p["down_w"][:, :, 0, 0])
    return yb + res


# ----------------------------------------------------------------------------- sparsemax
def sparsemax(z, axis=-1):
    d = z.shape[axis]
    z_sorted = -jnp.sort(-z, axis=axis)
    shape = [1] * z.ndim
    shape[axis] = d
    k = jnp.arange(1, d + 1, dtype=z.dtype).reshape(shape)
    z_cumsum = jnp.cumsum(z_sorted, axis=axis)
    support = (1.0 + k * z_sorted) > z_cumsum
    k_z = jnp.sum(support.astype(z.dtype), axis=axis, keepdims=True)
    tau_sum = jnp.take_along_axis(z_cumsum, (k_z - 1).astype(jnp.int32), axis=axis)
    tau = (tau_sum - 1.0) / k_z
    return jnp.maximum(z - tau, 0.0)


# ----------------------------------------------------------------------------- parameter init
def _conv_w(key, Cout, Cin, k):
    return jax.random.normal(key, (Cout, Cin, k, k), jnp.float32) / jnp.sqrt(Cin * k * k)


def _bn_affine(key, Cout, eps=1e-5):
    k1, k2 = jax.random.split(key)
    gamma = 1.0 + 0.01 * jax.random.normal(k1, (Cout,), jnp.float32)
    beta = 0.01 * jax.random.normal(k2, (Cout,), jnp.float32)
    return gamma / jnp.sqrt(1.0 + eps), beta          # eval-mode: running_mean=0, running_var=1


def init_relu_conv_bn(key, Cin, Cout, k):
    k1, k2 = jax.random.split(key)
    return {"w": _conv_w(k1, Cout, Cin, k), "sb": _bn_affine(k2, Cout)}


def init_network(key, C, N, max_nodes, num_classes, search_space):
    num_ops = len(search_space)
    edges = [(i, j) for i in range(1, max_nodes) for j in range(i)]
    edge2index = {e: idx for idx, e in enumerate(edges)}
    num_edge = len(edges)

    keys = jax.random.split(key, 8)
    params = {"stem": {"w": _conv_w(keys[0], C, 3, 3), "sb": _bn_affine(keys[1], C)}}

    layer_channels = [C] * N + [C * 2] + [C * 2] * N + [C * 4] + [C * 4] * N
    layer_reductions = [False] * N + [True] + [False] * N + [True] + [False] * N

    cells, kinds = [], []
    C_prev = C
    ckey = keys[2]
    for C_curr, reduction in zip(layer_channels, layer_reductions):
        ckey, sub = jax.random.split(ckey)
        if reduction:  # ResNetBasicblock(C_prev, C_curr, stride=2)
            k1, k2, k3 = jax.random.split(sub, 3)
            cells.append({
                "conv_a": init_relu_conv_bn(k1, C_prev, C_curr, 3),
                "conv_b": init_relu_conv_bn(k2, C_curr, C_curr, 3),
                "down_w": _conv_w(k3, C_curr, C_prev, 1),
            })
            kinds.append("resnet")
        else:          # SearchCell(C_prev, C_curr, stride=1)
            eks = jax.random.split(sub, num_edge)
            eparams = []
            for ek in eks:
                a1, a2 = jax.random.split(ek)
                eparams.append({
                    "conv1": init_relu_conv_bn(a1, C_prev, C_curr, 1),
                    "conv3": init_relu_conv_bn(a2, C_prev, C_curr, 3),
                })
            cells.append({"edges": eparams})
            kinds.append("search")
        C_prev = C_curr

    params["cells"] = cells
    params["lastact"] = _bn_affine(keys[3], C_prev)
    params["cls_w"] = jax.random.normal(keys[4], (num_classes, C_prev), jnp.float32) / jnp.sqrt(C_prev)
    params["cls_b"] = 0.01 * jax.random.normal(keys[5], (num_classes,), jnp.float32)
    params["arch"] = 0.001 * jax.random.normal(keys[6], (num_edge, num_ops), jnp.float32)

    meta = {"edges": edges, "edge2index": edge2index, "cell_kinds": kinds}
    return params, meta


# ----------------------------------------------------------------------------- forward
def forward(params, x_nchw, *, meta, max_nodes, search_space):
    op_idx = {name: i for i, name in enumerate(search_space)}
    edge2index = meta["edge2index"]

    x = jnp.transpose(x_nchw, (0, 2, 3, 1)).astype(jnp.float32)      # NCHW -> NHWC
    alphas = sparsemax(params["arch"], axis=-1)                      # Sparsemax(dim=1)

    # stem: Conv3x3 + BN (XLA conv; BN folded into scale/bias)
    s0, b0 = params["stem"]["sb"]
    f = conv2d_nhwc(x, params["stem"]["w"], 1, 1) * s0 + b0

    for kind, cp in zip(meta["cell_kinds"], params["cells"]):
        if kind == "search":
            f = search_cell_fused(f, cp["edges"], alphas, max_nodes=max_nodes,
                                  edge2index=edge2index, op_idx=op_idx)
        else:
            f = resnet_block_forward(f, cp)

    ls, lb = params["lastact"]
    f = jnp.maximum(f * ls + lb, 0.0)                                # lastact: BN + ReLU
    pooled = jnp.mean(f, axis=(1, 2))                                # AdaptiveAvgPool2d(1) + view
    logits = pooled @ params["cls_w"].T + params["cls_b"]            # tiny classifier -> XLA
    return pooled, logits


# ----------------------------------------------------------------------------- main
if __name__ == "__main__":
    C, N, max_nodes, num_classes = 4, 1, 4, 10
    search_space = list(OP_NAMES)

    key = jax.random.PRNGKey(0)
    kp, kx = jax.random.split(key)
    params, meta = init_network(kp, C, N, max_nodes, num_classes, search_space)

    x = jax.random.normal(kx, (2, 3, 16, 16), jnp.float32)           # NCHW, like PyTorch input

    fwd = jax.jit(functools.partial(forward, meta=meta, max_nodes=max_nodes,
                                    search_space=search_space))
    pooled, logits = fwd(params, x)
    pooled, logits = jax.block_until_ready((pooled, logits))

    assert pooled.shape == (2, 4 * C), pooled.shape
    assert logits.shape == (2, num_classes), logits.shape
    assert bool(jnp.all(jnp.isfinite(pooled))) and bool(jnp.all(jnp.isfinite(logits)))
    print("KERNEL_OK")
</pallas_src>

<mosaic_0001>
module attributes {stable_mosaic.version = 11 : i64} {
  func.func @k(%arg0: memref<8x128xf32, #tpu.memory_space<vmem>>, %arg1: memref<8x128xf32, #tpu.memory_space<vmem>>) attributes {dimension_semantics = [], scalar_prefetch = 0 : i64, scratch_operands = 0 : i64, tpu.core_type = #tpu.core_type<tc>} {
    %c0 = arith.constant 0 : index
    %c0_0 = arith.constant 0 : index
    %0 = vector.load %arg0[%c0, %c0_0] : memref<8x128xf32, #tpu.memory_space<vmem>>, vector<8x128xf32>
    %c1_i32 = arith.constant 1 : i32
    %1 = tpu.dynamic_rotate %0 by %c1_i32 dim 1 : vector<8x128xf32>, i32 -> vector<8x128xf32>
    %c0_1 = arith.constant 0 : index
    %c0_2 = arith.constant 0 : index
    %2 = vector.load %arg1[%c0_1, %c0_2] : memref<8x128xf32, #tpu.memory_space<vmem>>, vector<8x128xf32>
    tpu.vector_store %arg1[%c0_1, %c0_2], %1 {strides = array<i32>} : memref<8x128xf32, #tpu.memory_space<vmem>>, vector<8x128xf32>,
    return
  }
}

</mosaic_0001>

<llo_original>
// kernel: tpu_custom_call.1
$region0: #{tpu_custom_call.1}
  #allocation0 [shape = 'u32[]', space=smem, size = 0x4, offset = 0x4, fixed_abs, tag = 'smem constant byte address 0x4 - core index']
  #allocation1 [shape = 'u32[72,128]{1,0:T(1,128)}', space=vmem, size = 0x9000, scoped, tag = 'internal scratch']
  %s0 = inlined_call_operand.hbm [shape: f32[8,128], index: 0, kind: input, shape index: {}]
  %s1 = inlined_call_operand.hbm [shape: f32[8,128], index: 1, kind: output, shape index: {}]
  %s2 = sld [smem:[#allocation0]]
  $region18: #{tpu_custom_call.1} parent=0
    _
  %s4 = ssub.s32 1, %s2
  %s5 = scalar_select 0, %s4, %s2
  $region1: #{tpu_custom_call.1} parent=0
    #allocation2 [shape = 'u8[4096]{0}', space=vmem, size = 0x1000, scoped, tag = 'input window, operand 0, single buffered']
    #allocation3 [shape = 's32[1]{0}', space=sflag, size = 0x4, scoped, tag = 'scoped memory for tpu_custom_call.1']
    #allocation4 [shape = 's32[1]{0}', space=sflag, size = 0x4, scoped, tag = 'scoped memory for tpu_custom_call.1']
    #allocation5 [shape = 'u8[4096]{0}', space=vmem, size = 0x1000, scoped, tag = 'output window, operand 0, single buffered']
    %6 = vsyncpa [#allocation3], 0
    %7 = vsyncpa [#allocation4], 0
    // Predicated region
    $region2: #{tpu_custom_call.1} parent=1 // pred_check
      _
    $region3: #{tpu_custom_call.1} parent=1 // pred_check_branch
      %9 = sbr.rel (0) target = $region5
    $region4: #{tpu_custom_call.1} parent=1 // pred_region
      %11 = vsyncadd [#allocation3], 0
      %s13 = sshll.u32 %s0, 4
      %s14 = int_to_ptr.hbm [resolvable:$true] %s13
      %s15 = sshll.u32 [#allocation2], 4
      %s16 = int_to_ptr.vmem [resolvable:$true] %s15
      %18 = dma.hbm_to_vmem [thread:$0]  %s14, 128, %s16, [#allocation3]
    $region5: #{tpu_custom_call.1} parent=1 // pred_fallthru
      _
    // Predicated region
    $region6: #{tpu_custom_call.1} parent=1 // pred_check
      _
    $region7: #{tpu_custom_call.1} parent=1 // pred_check_branch
      %20 = sbr.rel (0) target = $region9
    $region8: #{tpu_custom_call.1} parent=1 // pred_region
      %22 = dma.done [#allocation3], 128
    $region9: #{tpu_custom_call.1} parent=1 // pred_fallthru
      _
    %v23 = vld [vmem:[#allocation2] sm:$0xff]
    %24 = vrot.lane.b32.xlu0 %v23, 1
    %v25 = vpop.permute.xlu0 %24
    %26 = vst [vmem:[#allocation5] sm:$0xff] %v25
    // Predicated region
    $region10: #{tpu_custom_call.1} parent=1 // pred_check
      _
    $region11: #{tpu_custom_call.1} parent=1 // pred_check_branch
      %28 = sbr.rel (0) target = $region13
    $region12: #{tpu_custom_call.1} parent=1 // pred_region
      %30 = vsyncadd [#allocation4], 0
      %s32 = sshll.u32 [#allocation5], 4
      %s33 = int_to_ptr.vmem [resolvable:$true] %s32
      %s34 = sshll.u32 %s1, 4
      %s35 = int_to_ptr.hbm [resolvable:$true] %s34
      %37 = dma.vmem_to_hbm [thread:$0]  %s33, 128, %s35, [#allocation4]
    $region13: #{tpu_custom_call.1} parent=1 // pred_fallthru
      _
    // Predicated region
    $region14: #{tpu_custom_call.1} parent=1 // pred_check
      _
    $region15: #{tpu_custom_call.1} parent=1 // pred_check_branch
      %39 = sbr.rel (0) target = $region17
    $region16: #{tpu_custom_call.1} parent=1 // pred_region
      %41 = dma.done [#allocation4], 128
    $region17: #{tpu_custom_call.1} parent=1 // pred_fallthru
      _
    %42 = vsyncpa [#allocation3], 1
    %43 = vsyncpa [#allocation4], 1

</llo_original>
